<compile_context>
chip_gen: v5e
topology: v5e:2x2
jax: 0.10.0
libtpu: 0.0.40
codegen_flags: <defaults>
</compile_context>

<pallas_src>
import functools

import jax
import jax.numpy as jnp
from jax.experimental import pallas as pl
from jax.experimental.pallas import tpu as pltpu

EPSILON = 1e-10


def dynamics_kernel(obs_ref, acts_ref,
                    w1o_ref, w1a_ref, b1_ref,
                    w2_ref, b2_ref,
                    w3_ref, b3_ref,
                    out_ref):
    # Batch-major tiles: (TB, feat).  All normalization is pre-folded into the
    # weights/biases, so the body is pure matmul + ReLU + residual.
    obs = obs_ref[...]                                   # (TB, obs_dim)
    acts = acts_ref[...]                                 # (TB, acts_dim)

    # Layer 1 on the (virtually) concatenated, normalized input.
    h1 = (jnp.dot(obs, w1o_ref[...], preferred_element_type=jnp.float32)
          + jnp.dot(acts, w1a_ref[...], preferred_element_type=jnp.float32)
          + b1_ref[...])
    h1 = jnp.maximum(h1, 0.0)

    # Layer 2 + ReLU.
    h2 = jnp.dot(h1, w2_ref[...], preferred_element_type=jnp.float32) + b2_ref[...]
    h2 = jnp.maximum(h2, 0.0)

    # Layer 3 (unnormalize already folded in) + residual add.
    out_ref[...] = (obs
                    + jnp.dot(h2, w3_ref[...], preferred_element_type=jnp.float32)
                    + b3_ref[...])


def prepare_dynamics(params, norm, obs_dim):
    """One-time prep: fold normalization/unnormalization affines into the
    layer-1 / layer-3 weights and biases, and pre-transpose weights to
    (in, out) layout so the kernel needs no transposes at all."""
    f32 = lambda x: jnp.asarray(x, jnp.float32)

    w1 = f32(params["w1"])                    # (H, obs_dim + acts_dim)
    b1 = f32(params["b1"])                    # (H,)
    w2 = f32(params["w2"])                    # (H, H)
    b2 = f32(params["b2"])                    # (H,)
    w3 = f32(params["w3"])                    # (obs_dim, H)
    b3 = f32(params["b3"])                    # (obs_dim,)

    obs_mean = f32(norm["obs_mean"])
    acts_mean = f32(norm["acts_mean"])
    delta_mean = f32(norm["delta_mean"])
    obs_s = 1.0 / (f32(norm["obs_std"]) + EPSILON)
    acts_s = 1.0 / (f32(norm["acts_std"]) + EPSILON)
    delta_std = f32(norm["delta_std"])

    w1o = w1[:, :obs_dim]                     # (H, obs_dim)
    w1a = w1[:, obs_dim:]                     # (H, acts_dim)

    # Fold input normalization:  (x - mean) * s @ W^T  ==  x @ (W^T * s) - (mean*s) @ W^T
    w1o_t = w1o.T * obs_s[:, None]            # (obs_dim, H)
    w1a_t = w1a.T * acts_s[:, None]           # (acts_dim, H)
    b1_f = b1 - (obs_mean * obs_s) @ w1o.T - (acts_mean * acts_s) @ w1a.T  # (H,)

    # Fold delta unnormalization:  (h @ W3^T + b3) * std + mean
    w3_t = w3.T * delta_std[None, :]          # (H, obs_dim)
    b3_f = b3 * delta_std + delta_mean        # (obs_dim,)

    prep = {
        "w1o_t": w1o_t, "w1a_t": w1a_t, "b1": b1_f[None, :],
        "w2_t": w2.T, "b2": b2[None, :],
        "w3_t": w3_t, "b3": b3_f[None, :],
    }
    return jax.device_put(prep)


@functools.partial(jax.jit, static_argnames=("block_b",))
def dynamics_forward(obs, acts, prep, *, block_b=4096):
    """obs: (B, obs_dim), acts: (B, acts_dim) -> next-obs prediction (B, obs_dim)."""
    B, obs_dim = obs.shape
    acts_dim = acts.shape[1]
    H = prep["w2_t"].shape[0]

    obs = obs.astype(jnp.float32)
    acts = acts.astype(jnp.float32)

    if B <= block_b:
        # Single tile: block == full array dims, minimal launch overhead.
        tb = B
        n_blocks = 1
        b_pad = B
    else:
        assert block_b % 128 == 0, "block_b must be a multiple of 128"
        tb = block_b
        n_blocks = pl.cdiv(B, tb)
        b_pad = n_blocks * tb
        if b_pad != B:
            # Keep every tile fully (8,128)-aligned; padded rows are zeros
            # (harmless: linear/ReLU math, output sliced off below).
            obs = jnp.pad(obs, ((0, b_pad - B), (0, 0)))
            acts = jnp.pad(acts, ((0, b_pad - B), (0, 0)))

    stream = lambda d: pl.BlockSpec((tb, d), lambda i: (i, 0))       # per batch tile
    resident = lambda shp: pl.BlockSpec(shp, lambda i: (0, 0))       # fetched once

    out = pl.pallas_call(
        dynamics_kernel,
        out_shape=jax.ShapeDtypeStruct((b_pad, obs_dim), jnp.float32),
        grid=(n_blocks,),
        in_specs=[
            stream(obs_dim), stream(acts_dim),
            resident((obs_dim, H)), resident((acts_dim, H)), resident((1, H)),
            resident((H, H)), resident((1, H)),
            resident((H, obs_dim)), resident((1, obs_dim)),
        ],
        out_specs=pl.BlockSpec((tb, obs_dim), lambda i: (i, 0)),
        compiler_params=pltpu.CompilerParams(
            # Batch tiles are independent -> shard grid steps across TCs (v7x).
            dimension_semantics=("parallel",),
            # Explicit VMEM budget so tiling tuned on v5e/v6e stays safe on v7x.
            vmem_limit_bytes=32 * 1024 * 1024,
        ),
    )(obs, acts,
      prep["w1o_t"], prep["w1a_t"], prep["b1"],
      prep["w2_t"], prep["b2"],
      prep["w3_t"], prep["b3"])

    return out[:B] if b_pad != B else out


def init_params(key, obs_dim, acts_dim, num_hidden):
    ks = jax.random.split(key, 6)
    in1 = obs_dim + acts_dim

    def lin(kw, kb, fan_in, fan_out):
        bound = 1.0 / jnp.sqrt(fan_in)
        w = jax.random.uniform(kw, (fan_out, fan_in), jnp.float32, -bound, bound)
        b = jax.random.uniform(kb, (fan_out,), jnp.float32, -bound, bound)
        return w, b

    w1, b1 = lin(ks[0], ks[1], in1, num_hidden)
    w2, b2 = lin(ks[2], ks[3], num_hidden, num_hidden)
    w3, b3 = lin(ks[4], ks[5], num_hidden, obs_dim)
    return {"w1": w1, "b1": b1, "w2": w2, "b2": b2, "w3": w3, "b3": b3}


def reference_forward(obs, acts, params, norm):
    """Pure-JAX reference matching the PyTorch module exactly (unfolded math)."""
    obs_n = (obs - norm["obs_mean"]) / (norm["obs_std"] + EPSILON)
    acts_n = (acts - norm["acts_mean"]) / (norm["acts_std"] + EPSILON)
    x = jnp.concatenate([obs_n, acts_n], axis=1)
    x = jnp.maximum(x @ params["w1"].T + params["b1"], 0.0)
    x = jnp.maximum(x @ params["w2"].T + params["b2"], 0.0)
    delta_n = x @ params["w3"].T + params["b3"]
    delta = delta_n * norm["delta_std"] + norm["delta_mean"]
    return obs + delta


if __name__ == "__main__":
    B, OBS_DIM, ACTS_DIM, HIDDEN = 256, 8, 4, 32

    key = jax.random.PRNGKey(0)
    k_obs, k_acts, k_params, k_norm = jax.random.split(key, 4)

    obs = jax.random.normal(k_obs, (B, OBS_DIM), jnp.float32)
    acts = jax.random.normal(k_acts, (B, ACTS_DIM), jnp.float32)

    params = init_params(k_params, OBS_DIM, ACTS_DIM, HIDDEN)

    kn = jax.random.split(k_norm, 6)
    norm = {
        "obs_mean": jax.random.normal(kn[0], (OBS_DIM,), jnp.float32),
        "obs_std": jnp.abs(jax.random.normal(kn[1], (OBS_DIM,), jnp.float32)) + 0.5,
        "acts_mean": jax.random.normal(kn[2], (ACTS_DIM,), jnp.float32),
        "acts_std": jnp.abs(jax.random.normal(kn[3], (ACTS_DIM,), jnp.float32)) + 0.5,
        "delta_mean": jax.random.normal(kn[4], (OBS_DIM,), jnp.float32),
        "delta_std": jnp.abs(jax.random.normal(kn[5], (OBS_DIM,), jnp.float32)) + 0.5,
    }

    # One-time folding / layout prep (outside the per-call hot path).
    prep = prepare_dynamics(params, norm, OBS_DIM)

    ref = reference_forward(obs, acts, params, norm)

    # 1) Default path: B <= block_b -> single big tile, grid=(1,).
    out_single = jax.block_until_ready(dynamics_forward(obs, acts, prep))
    assert out_single.shape == (B, OBS_DIM)
    assert jnp.allclose(out_single, ref, atol=1e-4, rtol=1e-4), "mismatch (single tile)"

    # 2) Tiled path: block_b=128 -> grid of 2 batch tiles (exercises streaming
    #    / megacore split on v7x).
    out_tiled = jax.block_until_ready(dynamics_forward(obs, acts, prep, block_b=128))
    assert out_tiled.shape == (B, OBS_DIM)
    assert jnp.allclose(out_tiled, ref, atol=1e-4, rtol=1e-4), "mismatch (tiled)"

    print("KERNEL_OK")
</pallas_src>

<mosaic_0001>
module attributes {stable_mosaic.version = 11 : i64} {
  func.func @dynamics_kernel(%arg0: i32, %arg1: memref<256x8xf32, #tpu.memory_space<vmem>>, %arg2: memref<256x4xf32, #tpu.memory_space<vmem>>, %arg3: memref<8x32xf32, #tpu.memory_space<vmem>>, %arg4: memref<4x32xf32, #tpu.memory_space<vmem>>, %arg5: memref<1x32xf32, #tpu.memory_space<vmem>>, %arg6: memref<32x32xf32, #tpu.memory_space<vmem>>, %arg7: memref<1x32xf32, #tpu.memory_space<vmem>>, %arg8: memref<32x8xf32, #tpu.memory_space<vmem>>, %arg9: memref<1x8xf32, #tpu.memory_space<vmem>>, %arg10: memref<256x8xf32, #tpu.memory_space<vmem>>) attributes {dimension_semantics = [#tpu.dimension_semantics<parallel>], iteration_bounds = array<i64: 1>, scalar_prefetch = 0 : i64, scratch_operands = 0 : i64, tpu.core_type = #tpu.core_type<tc>, window_params = [{transform_indices = @transform_0, window_bounds = array<i64: 256, 8>}, {transform_indices = @transform_1, window_bounds = array<i64: 256, 4>}, {pipeline_mode = #tpu.pipeline_mode<synchronous>, transform_indices = @transform_2, window_bounds = array<i64: 8, 32>}, {pipeline_mode = #tpu.pipeline_mode<synchronous>, transform_indices = @transform_3, window_bounds = array<i64: 4, 32>}, {pipeline_mode = #tpu.pipeline_mode<synchronous>, transform_indices = @transform_4, window_bounds = array<i64: 1, 32>}, {pipeline_mode = #tpu.pipeline_mode<synchronous>, transform_indices = @transform_5, window_bounds = array<i64: 32, 32>}, {pipeline_mode = #tpu.pipeline_mode<synchronous>, transform_indices = @transform_6, window_bounds = array<i64: 1, 32>}, {pipeline_mode = #tpu.pipeline_mode<synchronous>, transform_indices = @transform_7, window_bounds = array<i64: 32, 8>}, {pipeline_mode = #tpu.pipeline_mode<synchronous>, transform_indices = @transform_8, window_bounds = array<i64: 1, 8>}, {transform_indices = @transform_9, window_bounds = array<i64: 256, 8>}]} {
    %c0 = arith.constant 0 : index
    %c0_0 = arith.constant 0 : index
    %0 = vector.load %arg1[%c0, %c0_0] : memref<256x8xf32, #tpu.memory_space<vmem>>, vector<256x8xf32>
    %c0_1 = arith.constant 0 : index
    %c0_2 = arith.constant 0 : index
    %1 = vector.load %arg2[%c0_1, %c0_2] : memref<256x4xf32, #tpu.memory_space<vmem>>, vector<256x4xf32>
    %c0_3 = arith.constant 0 : index
    %c0_4 = arith.constant 0 : index
    %2 = vector.load %arg3[%c0_3, %c0_4] : memref<8x32xf32, #tpu.memory_space<vmem>>, vector<8x32xf32>
    %cst = arith.constant dense<0.000000e+00> : vector<256x32xf32>
    %3 = tpu.matmul %0, %2, %cst {dimension_numbers = #tpu.dot_dimension_numbers<[1], [0], [0], [1], [0, 0, 1, 1], [], []>} : vector<256x8xf32>, vector<8x32xf32>, vector<256x32xf32> -> vector<256x32xf32>
    %c0_5 = arith.constant 0 : index
    %c0_6 = arith.constant 0 : index
    %4 = vector.load %arg4[%c0_5, %c0_6] : memref<4x32xf32, #tpu.memory_space<vmem>>, vector<4x32xf32>
    %cst_7 = arith.constant dense<0.000000e+00> : vector<256x32xf32>
    %5 = tpu.matmul %1, %4, %cst_7 {dimension_numbers = #tpu.dot_dimension_numbers<[1], [0], [0], [1], [0, 0, 1, 1], [], []>} : vector<256x4xf32>, vector<4x32xf32>, vector<256x32xf32> -> vector<256x32xf32>
    %6 = arith.addf %3, %5 : vector<256x32xf32>
    %c0_8 = arith.constant 0 : index
    %c0_9 = arith.constant 0 : index
    %7 = vector.load %arg5[%c0_8, %c0_9] : memref<1x32xf32, #tpu.memory_space<vmem>>, vector<1x32xf32>
    %8 = vector.broadcast %7 : vector<1x32xf32> to vector<256x32xf32>
    %9 = arith.addf %6, %8 : vector<256x32xf32>
    %cst_10 = arith.constant 0.000000e+00 : f32
    %10 = vector.broadcast %cst_10 : f32 to vector<256x32xf32>
    %11 = arith.maximumf %9, %10 : vector<256x32xf32>
    %c0_11 = arith.constant 0 : index
    %c0_12 = arith.constant 0 : index
    %12 = vector.load %arg6[%c0_11, %c0_12] : memref<32x32xf32, #tpu.memory_space<vmem>>, vector<32x32xf32>
    %cst_13 = arith.constant dense<0.000000e+00> : vector<256x32xf32>
    %13 = tpu.matmul %11, %12, %cst_13 {dimension_numbers = #tpu.dot_dimension_numbers<[1], [0], [0], [1], [0, 0, 1, 1], [], []>} : vector<256x32xf32>, vector<32x32xf32>, vector<256x32xf32> -> vector<256x32xf32>
    %c0_14 = arith.constant 0 : index
    %c0_15 = arith.constant 0 : index
    %14 = vector.load %arg7[%c0_14, %c0_15] : memref<1x32xf32, #tpu.memory_space<vmem>>, vector<1x32xf32>
    %15 = vector.broadcast %14 : vector<1x32xf32> to vector<256x32xf32>
    %16 = arith.addf %13, %15 : vector<256x32xf32>
    %cst_16 = arith.constant 0.000000e+00 : f32
    %17 = vector.broadcast %cst_16 : f32 to vector<256x32xf32>
    %18 = arith.maximumf %16, %17 : vector<256x32xf32>
    %c0_17 = arith.constant 0 : index
    %c0_18 = arith.constant 0 : index
    %19 = vector.load %arg8[%c0_17, %c0_18] : memref<32x8xf32, #tpu.memory_space<vmem>>, vector<32x8xf32>
    %cst_19 = arith.constant dense<0.000000e+00> : vector<256x8xf32>
    %20 = tpu.matmul %18, %19, %cst_19 {dimension_numbers = #tpu.dot_dimension_numbers<[1], [0], [0], [1], [0, 0, 1, 1], [], []>} : vector<256x32xf32>, vector<32x8xf32>, vector<256x8xf32> -> vector<256x8xf32>
    %21 = arith.addf %0, %20 : vector<256x8xf32>
    %c0_20 = arith.constant 0 : index
    %c0_21 = arith.constant 0 : index
    %22 = vector.load %arg9[%c0_20, %c0_21] : memref<1x8xf32, #tpu.memory_space<vmem>>, vector<1x8xf32>
    %23 = vector.broadcast %22 : vector<1x8xf32> to vector<256x8xf32>
    %24 = arith.addf %21, %23 : vector<256x8xf32>
    %c0_22 = arith.constant 0 : index
    %c0_23 = arith.constant 0 : index
    %25 = vector.load %arg10[%c0_22, %c0_23] : memref<256x8xf32, #tpu.memory_space<vmem>>, vector<256x8xf32>
    tpu.vector_store %arg10[%c0_22, %c0_23], %24 {strides = array<i32>} : memref<256x8xf32, #tpu.memory_space<vmem>>, vector<256x8xf32>,
    return
  }
  func.func @transform_0(%arg0: i32) -> (i32, i32) {
    %c0_i32 = arith.constant 0 : i32
    %c0_i32_0 = arith.constant 0 : i32
    return %arg0, %c0_i32 : i32, i32
  }
  func.func @transform_1(%arg0: i32) -> (i32, i32) {
    %c0_i32 = arith.constant 0 : i32
    %c0_i32_0 = arith.constant 0 : i32
    return %arg0, %c0_i32 : i32, i32
  }
  func.func @transform_2(%arg0: i32) -> (i32, i32) {
    %c0_i32 = arith.constant 0 : i32
    %c0_i32_0 = arith.constant 0 : i32
    %c0_i32_1 = arith.constant 0 : i32
    return %c0_i32, %c0_i32_0 : i32, i32
  }
  func.func @transform_3(%arg0: i32) -> (i32, i32) {
    %c0_i32 = arith.constant 0 : i32
    %c0_i32_0 = arith.constant 0 : i32
    %c0_i32_1 = arith.constant 0 : i32
    return %c0_i32, %c0_i32_0 : i32, i32
  }
  func.func @transform_4(%arg0: i32) -> (i32, i32) {
    %c0_i32 = arith.constant 0 : i32
    %c0_i32_0 = arith.constant 0 : i32
    %c0_i32_1 = arith.constant 0 : i32
    return %c0_i32, %c0_i32_0 : i32, i32
  }
  func.func @transform_5(%arg0: i32) -> (i32, i32) {
    %c0_i32 = arith.constant 0 : i32
    %c0_i32_0 = arith.constant 0 : i32
    %c0_i32_1 = arith.constant 0 : i32
    return %c0_i32, %c0_i32_0 : i32, i32
  }
  func.func @transform_6(%arg0: i32) -> (i32, i32) {
    %c0_i32 = arith.constant 0 : i32
    %c0_i32_0 = arith.constant 0 : i32
    %c0_i32_1 = arith.constant 0 : i32
    return %c0_i32, %c0_i32_0 : i32, i32
  }
  func.func @transform_7(%arg0: i32) -> (i32, i32) {
    %c0_i32 = arith.constant 0 : i32
    %c0_i32_0 = arith.constant 0 : i32
    %c0_i32_1 = arith.constant 0 : i32
    return %c0_i32, %c0_i32_0 : i32, i32
  }
  func.func @transform_8(%arg0: i32) -> (i32, i32) {
    %c0_i32 = arith.constant 0 : i32
    %c0_i32_0 = arith.constant 0 : i32
    %c0_i32_1 = arith.constant 0 : i32
    return %c0_i32, %c0_i32_0 : i32, i32
  }
  func.func @transform_9(%arg0: i32) -> (i32, i32) {
    %c0_i32 = arith.constant 0 : i32
    %c0_i32_0 = arith.constant 0 : i32
    return %arg0, %c0_i32 : i32, i32
  }
}

</mosaic_0001>

<llo_original>
// kernel: dynamics_forward.1
$region0: #{dynamics_forward.1}
  #allocation0 [shape = 'u32[]', space=smem, size = 0x4, offset = 0x4, fixed_abs, tag = 'smem constant byte address 0x4 - core index']
  #allocation1 [shape = 'u32[72,128]{1,0:T(1,128)}', space=vmem, size = 0x9000, scoped, tag = 'internal scratch']
  %s0 = inlined_call_operand.vmem [shape: f32[256,8], index: 0, kind: input, shape index: {}]
  %s1 = inlined_call_operand.vmem [shape: f32[256,4], index: 1, kind: input, shape index: {}]
  %s2 = inlined_call_operand.vmem [shape: f32[8,32], index: 2, kind: input, shape index: {}]
  %s3 = inlined_call_operand.vmem [shape: f32[4,32], index: 3, kind: input, shape index: {}]
  %s4 = inlined_call_operand.vmem [shape: f32[1,32], index: 4, kind: input, shape index: {}]
  %s5 = inlined_call_operand.vmem [shape: f32[32,32], index: 5, kind: input, shape index: {}]
  %s6 = inlined_call_operand.vmem [shape: f32[1,32], index: 6, kind: input, shape index: {}]
  %s7 = inlined_call_operand.vmem [shape: f32[32,8], index: 7, kind: input, shape index: {}]
  %s8 = inlined_call_operand.vmem [shape: f32[1,8], index: 8, kind: input, shape index: {}]
  %s9 = inlined_call_operand.vmem [shape: f32[256,8], index: 9, kind: output, shape index: {}]
  %s10 = sld [smem:[#allocation0]]
  $region46: #{dynamics_forward.1} parent=0
    _
  %s12 = ssub.s32 1, %s10
  %s13 = scalar_select 0, %s12, %s10
  // Predicated region
  $region2: #{dynamics_forward.1} parent=0 // pred_check
    _
  $region3: #{dynamics_forward.1} parent=0 // pred_check_branch
    %15 = sbr.rel (0) target = $region5
  $region4: #{dynamics_forward.1} parent=0 // pred_region
    _
  $region5: #{dynamics_forward.1} parent=0 // pred_fallthru
    _
  // Predicated region
  $region6: #{dynamics_forward.1} parent=0 // pred_check
    _
  $region7: #{dynamics_forward.1} parent=0 // pred_check_branch
    %17 = sbr.rel (0) target = $region9
  $region8: #{dynamics_forward.1} parent=0 // pred_region
    _
  $region9: #{dynamics_forward.1} parent=0 // pred_fallthru
    _
  // Predicated region
  $region10: #{dynamics_forward.1} parent=0 // pred_check
    _
  $region11: #{dynamics_forward.1} parent=0 // pred_check_branch
    %19 = sbr.rel (0) target = $region13
  $region12: #{dynamics_forward.1} parent=0 // pred_region
    _
  $region13: #{dynamics_forward.1} parent=0 // pred_fallthru
    _
  // Predicated region
  $region14: #{dynamics_forward.1} parent=0 // pred_check
    _
  $region15: #{dynamics_forward.1} parent=0 // pred_check_branch
    %21 = sbr.rel (0) target = $region17
  $region16: #{dynamics_forward.1} parent=0 // pred_region
    _
  $region17: #{dynamics_forward.1} parent=0 // pred_fallthru
    _
  // Predicated region
  $region18: #{dynamics_forward.1} parent=0 // pred_check
    _
  $region19: #{dynamics_forward.1} parent=0 // pred_check_branch
    %23 = sbr.rel (0) target = $region21
  $region20: #{dynamics_forward.1} parent=0 // pred_region
    _
  $region21: #{dynamics_forward.1} parent=0 // pred_fallthru
    _
  // Predicated region
  $region22: #{dynamics_forward.1} parent=0 // pred_check
    _
  $region23: #{dynamics_forward.1} parent=0 // pred_check_branch
    %25 = sbr.rel (0) target = $region25
  $region24: #{dynamics_forward.1} parent=0 // pred_region
    _
  $region25: #{dynamics_forward.1} parent=0 // pred_fallthru
    _
  // Predicated region
  $region26: #{dynamics_forward.1} parent=0 // pred_check
    _
  $region27: #{dynamics_forward.1} parent=0 // pred_check_branch
    %27 = sbr.rel (0) target = $region29
  $region28: #{dynamics_forward.1} parent=0 // pred_region
    _
  $region29: #{dynamics_forward.1} parent=0 // pred_fallthru
    _
  // Predicated region
  $region30: #{dynamics_forward.1} parent=0 // pred_check
    _
  $region31: #{dynamics_forward.1} parent=0 // pred_check_branch
    %29 = sbr.rel (0) target = $region33
  $region32: #{dynamics_forward.1} parent=0 // pred_region
    _
  $region33: #{dynamics_forward.1} parent=0 // pred_fallthru
    _
  // Predicated region
  $region34: #{dynamics_forward.1} parent=0 // pred_check
    _
  $region35: #{dynamics_forward.1} parent=0 // pred_check_branch
    %31 = sbr.rel (0) target = $region37
  $region36: #{dynamics_forward.1} parent=0 // pred_region
    _
  $region37: #{dynamics_forward.1} parent=0 // pred_fallthru
    _
  %v32 = vld [vmem:[%s0] sm:$0xff]
  %v33 = vld [vmem:[%s0 + $0x8] sm:$0xff]
  %v34 = vld [vmem:[%s0 + $0x10] sm:$0xff]
  %v35 = vld [vmem:[%s0 + $0x18] sm:$0xff]
  %v36 = vld [vmem:[%s0 + $0x20] sm:$0xff]
  %v37 = vld [vmem:[%s0 + $0x28] sm:$0xff]
  %v38 = vld [vmem:[%s0 + $0x30] sm:$0xff]
  %v39 = vld [vmem:[%s0 + $0x38] sm:$0xff]
  %v40 = vld [vmem:[%s0 + $0x40] sm:$0xff]
  %v41 = vld [vmem:[%s0 + $0x48] sm:$0xff]
  %v42 = vld [vmem:[%s0 + $0x50] sm:$0xff]
  %v43 = vld [vmem:[%s0 + $0x58] sm:$0xff]
  %v44 = vld [vmem:[%s0 + $0x60] sm:$0xff]
  %v45 = vld [vmem:[%s0 + $0x68] sm:$0xff]
  %v46 = vld [vmem:[%s0 + $0x70] sm:$0xff]
  %v47 = vld [vmem:[%s0 + $0x78] sm:$0xff]
  %v48 = vld [vmem:[%s0 + $0x80] sm:$0xff]
  %v49 = vld [vmem:[%s0 + $0x88] sm:$0xff]
  %v50 = vld [vmem:[%s0 + $0x90] sm:$0xff]
  %v51 = vld [vmem:[%s0 + $0x98] sm:$0xff]
  %v52 = vld [vmem:[%s0 + $0xa0] sm:$0xff]
  %v53 = vld [vmem:[%s0 + $0xa8] sm:$0xff]
  %v54 = vld [vmem:[%s0 + $0xb0] sm:$0xff]
  %v55 = vld [vmem:[%s0 + $0xb8] sm:$0xff]
  %v56 = vld [vmem:[%s0 + $0xc0] sm:$0xff]
  %v57 = vld [vmem:[%s0 + $0xc8] sm:$0xff]
  %v58 = vld [vmem:[%s0 + $0xd0] sm:$0xff]
  %v59 = vld [vmem:[%s0 + $0xd8] sm:$0xff]
  %v60 = vld [vmem:[%s0 + $0xe0] sm:$0xff]
  %v61 = vld [vmem:[%s0 + $0xe8] sm:$0xff]
  %v62 = vld [vmem:[%s0 + $0xf0] sm:$0xff]
  %v63 = vld [vmem:[%s0 + $0xf8] sm:$0xff]
  %v64 = vld [vmem:[%s1] sm:$0xff]
  %v65 = vld [vmem:[%s1 + $0x8] sm:$0xff]
  %v66 = vld [vmem:[%s1 + $0x10] sm:$0xff]
  %v67 = vld [vmem:[%s1 + $0x18] sm:$0xff]
  %v68 = vld [vmem:[%s1 + $0x20] sm:$0xff]
  %v69 = vld [vmem:[%s1 + $0x28] sm:$0xff]
  %v70 = vld [vmem:[%s1 + $0x30] sm:$0xff]
  %v71 = vld [vmem:[%s1 + $0x38] sm:$0xff]
  %v72 = vld [vmem:[%s1 + $0x40] sm:$0xff]
  %v73 = vld [vmem:[%s1 + $0x48] sm:$0xff]
  %v74 = vld [vmem:[%s1 + $0x50] sm:$0xff]
  %v75 = vld [vmem:[%s1 + $0x58] sm:$0xff]
  %v76 = vld [vmem:[%s1 + $0x60] sm:$0xff]
  %v77 = vld [vmem:[%s1 + $0x68] sm:$0xff]
  %v78 = vld [vmem:[%s1 + $0x70] sm:$0xff]
  %v79 = vld [vmem:[%s1 + $0x78] sm:$0xff]
  %v80 = vld [vmem:[%s1 + $0x80] sm:$0xff]
  %v81 = vld [vmem:[%s1 + $0x88] sm:$0xff]
  %v82 = vld [vmem:[%s1 + $0x90] sm:$0xff]
  %v83 = vld [vmem:[%s1 + $0x98] sm:$0xff]
  %v84 = vld [vmem:[%s1 + $0xa0] sm:$0xff]
  %v85 = vld [vmem:[%s1 + $0xa8] sm:$0xff]
  %v86 = vld [vmem:[%s1 + $0xb0] sm:$0xff]
  %v87 = vld [vmem:[%s1 + $0xb8] sm:$0xff]
  %v88 = vld [vmem:[%s1 + $0xc0] sm:$0xff]
  %v89 = vld [vmem:[%s1 + $0xc8] sm:$0xff]
  %v90 = vld [vmem:[%s1 + $0xd0] sm:$0xff]
  %v91 = vld [vmem:[%s1 + $0xd8] sm:$0xff]
  %v92 = vld [vmem:[%s1 + $0xe0] sm:$0xff]
  %v93 = vld [vmem:[%s1 + $0xe8] sm:$0xff]
  %v94 = vld [vmem:[%s1 + $0xf0] sm:$0xff]
  %v95 = vld [vmem:[%s1 + $0xf8] sm:$0xff]
  %v96 = vld [vmem:[%s2] sm:$0xff]
  %v97 = vld [vmem:[%s3] sm:$0xf]
  %vm98 = vcmask 31744
  %v100 = vsel %vm98, %v64, 0
  %v103 = vsel %vm98, %v65, 0
  %v106 = vsel %vm98, %v66, 0
  %v109 = vsel %vm98, %v67, 0
  %v112 = vsel %vm98, %v68, 0
  %v115 = vsel %vm98, %v69, 0
  %v118 = vsel %vm98, %v70, 0
  %v121 = vsel %vm98, %v71, 0
  %v124 = vsel %vm98, %v72, 0
  %v127 = vsel %vm98, %v73, 0
  %v130 = vsel %vm98, %v74, 0
  %v133 = vsel %vm98, %v75, 0
  %v136 = vsel %vm98, %v76, 0
  %v139 = vsel %vm98, %v77, 0
  %v142 = vsel %vm98, %v78, 0
  %v145 = vsel %vm98, %v79, 0
  %v148 = vsel %vm98, %v80, 0
  %v151 = vsel %vm98, %v81, 0
  %v154 = vsel %vm98, %v82, 0
  %v157 = vsel %vm98, %v83, 0
  %v160 = vsel %vm98, %v84, 0
  %v163 = vsel %vm98, %v85, 0
  %v166 = vsel %vm98, %v86, 0
  %v169 = vsel %vm98, %v87, 0
  %v172 = vsel %vm98, %v88, 0
  %v175 = vsel %vm98, %v89, 0
  %v178 = vsel %vm98, %v90, 0
  %v181 = vsel %vm98, %v91, 0
  %v184 = vsel %vm98, %v92, 0
  %v187 = vsel %vm98, %v93, 0
  %v190 = vsel %vm98, %v94, 0
  %v193 = vsel %vm98, %v95, 0
  %vm195 = vcmask 1043456
  %v197 = vsel %vm195, %v97, 0
  %199 = vmatpush.msra.mxu0 0.0
  %200 = vmatpush.msra.mxu0 0.0
  %201 = vmatpush.msra.mxu0 0.0
  %202 = vmatpush.msra.mxu0 0.0
  %203 = vmatpush.msra.mxu0 0.0
  %204 = vmatpush.msra.mxu0 0.0
  %205 = vmatpush.msra.mxu0 0.0
  %206 = vmatpush.msra.mxu0 0.0
  %207 = vmatpush.msra.mxu0 0.0
  %208 = vmatpush.msra.mxu0 0.0
  %209 = vmatpush.msra.mxu0 0.0
  %210 = vmatpush.msra.mxu0 0.0
  %211 = vmatpush.msra.mxu0 0.0
  %212 = vmatpush.msra.mxu0 0.0
  %213 = vmatpush.msra.mxu0 0.0
  %214 = vmatpush.msra.mxu0 %v197
  %215 = vmatmul.f32.gmra.mxu0 %v100
  %v216 = vpop.f32.mrf.mxu0
  %v217 = vadd.f32 0.0, %v216
  %218 = vmatmul.f32.gmra.mxu0 %v103
  %v219 = vpop.f32.mrf.mxu0
  %v220 = vadd.f32 0.0, %v219
  %221 = vmatmul.f32.gmra.mxu0 %v106
  %v222 = vpop.f32.mrf.mxu0
  %v223 = vadd.f32 0.0, %v222
  %224 = vmatmul.f32.gmra.mxu0 %v109
  %v225 = vpop.f32.mrf.mxu0
  %v226 = vadd.f32 0.0, %v225
  %227 = vmatmul.f32.gmra.mxu0 %v112
  %v228 = vpop.f32.mrf.mxu0
  %v229 = vadd.f32 0.0, %v228
  %230 = vmatmul.f32.gmra.mxu0 %v115
  %v231 = vpop.f32.mrf.mxu0
  %v232 = vadd.f32 0.0, %v231
  %233 = vmatmul.f32.gmra.mxu0 %v118
  %v234 = vpop.f32.mrf.mxu0
  %v235 = vadd.f32 0.0, %v234
  %236 = vmatmul.f32.gmra.mxu0 %v121
  %v237 = vpop.f32.mrf.mxu0
  %v238 = vadd.f32 0.0, %v237
  %239 = vmatmul.f32.gmra.mxu0 %v124
  %v240 = vpop.f32.mrf.mxu0
  %v241 = vadd.f32 0.0, %v240
  %242 = vmatmul.f32.gmra.mxu0 %v127
  %v243 = vpop.f32.mrf.mxu0
  %v244 = vadd.f32 0.0, %v243
  %245 = vmatmul.f32.gmra.mxu0 %v130
  %v246 = vpop.f32.mrf.mxu0
  %v247 = vadd.f32 0.0, %v246
  %248 = vmatmul.f32.gmra.mxu0 %v133
  %v249 = vpop.f32.mrf.mxu0
  %v250 = vadd.f32 0.0, %v249
  %251 = vmatmul.f32.gmra.mxu0 %v136
  %v252 = vpop.f32.mrf.mxu0
  %v253 = vadd.f32 0.0, %v252
  %254 = vmatmul.f32.gmra.mxu0 %v139
  %v255 = vpop.f32.mrf.mxu0
  %v256 = vadd.f32 0.0, %v255
  %257 = vmatmul.f32.gmra.mxu0 %v142
  %v258 = vpop.f32.mrf.mxu0
  %v259 = vadd.f32 0.0, %v258
  %260 = vmatmul.f32.gmra.mxu0 %v145
  %v261 = vpop.f32.mrf.mxu0
  %v262 = vadd.f32 0.0, %v261
  %263 = vmatmul.f32.gmra.mxu0 %v148
  %v264 = vpop.f32.mrf.mxu0
  %v265 = vadd.f32 0.0, %v264
  %266 = vmatmul.f32.gmra.mxu0 %v151
  %v267 = vpop.f32.mrf.mxu0
  %v268 = vadd.f32 0.0, %v267
  %269 = vmatmul.f32.gmra.mxu0 %v154
  %v270 = vpop.f32.mrf.mxu0
  %v271 = vadd.f32 0.0, %v270
  %272 = vmatmul.f32.gmra.mxu0 %v157
  %v273 = vpop.f32.mrf.mxu0
  %v274 = vadd.f32 0.0, %v273
  %275 = vmatmul.f32.gmra.mxu0 %v160
  %v276 = vpop.f32.mrf.mxu0
  %v277 = vadd.f32 0.0, %v276
  %278 = vmatmul.f32.gmra.mxu0 %v163
  %v279 = vpop.f32.mrf.mxu0
  %v280 = vadd.f32 0.0, %v279
  %281 = vmatmul.f32.gmra.mxu0 %v166
  %v282 = vpop.f32.mrf.mxu0
  %v283 = vadd.f32 0.0, %v282
  %284 = vmatmul.f32.gmra.mxu0 %v169
  %v285 = vpop.f32.mrf.mxu0
  %v286 = vadd.f32 0.0, %v285
  %287 = vmatmul.f32.gmra.mxu0 %v172
  %v288 = vpop.f32.mrf.mxu0
  %v289 = vadd.f32 0.0, %v288
  %290 = vmatmul.f32.gmra.mxu0 %v175
  %v291 = vpop.f32.mrf.mxu0
  %v292 = vadd.f32 0.0, %v291
  %293 = vmatmul.f32.gmra.mxu0 %v178
  %v294 = vpop.f32.mrf.mxu0
  %v295 = vadd.f32 0.0, %v294
  %296 = vmatmul.f32.gmra.mxu0 %v181
  %v297 = vpop.f32.mrf.mxu0
  %v298 = vadd.f32 0.0, %v297
  %299 = vmatmul.f32.gmra.mxu0 %v184
  %v300 = vpop.f32.mrf.mxu0
  %v301 = vadd.f32 0.0, %v300
  %302 = vmatmul.f32.gmra.mxu0 %v187
  %v303 = vpop.f32.mrf.mxu0
  %v304 = vadd.f32 0.0, %v303
  %305 = vmatmul.f32.gmra.mxu0 %v190
  %v306 = vpop.f32.mrf.mxu0
  %v307 = vadd.f32 0.0, %v306
  %308 = vmatmul.f32.gmra.mxu0 %v193
  %v309 = vpop.f32.mrf.mxu0
  %v310 = vadd.f32 0.0, %v309
  %311 = vdwg.mxu0
  %vm312 = vcmask 64512
  %v314 = vsel %vm312, %v32, 0
  %v317 = vsel %vm312, %v33, 0
  %v320 = vsel %vm312, %v34, 0
  %v323 = vsel %vm312, %v35, 0
  %v326 = vsel %vm312, %v36, 0
  %v329 = vsel %vm312, %v37, 0
  %v332 = vsel %vm312, %v38, 0
  %v335 = vsel %vm312, %v39, 0
  %v338 = vsel %vm312, %v40, 0
  %v341 = vsel %vm312, %v41, 0
  %v344 = vsel %vm312, %v42, 0
  %v347 = vsel %vm312, %v43, 0
  %v350 = vsel %vm312, %v44, 0
  %v353 = vsel %vm312, %v45, 0
  %v356 = vsel %vm312, %v46, 0
  %v359 = vsel %vm312, %v47, 0
  %v362 = vsel %vm312, %v48, 0
  %v365 = vsel %vm312, %v49, 0
  %v368 = vsel %vm312, %v50, 0
  %v371 = vsel %vm312, %v51, 0
  %v374 = vsel %vm312, %v52, 0
  %v377 = vsel %vm312, %v53, 0
  %v380 = vsel %vm312, %v54, 0
  %v383 = vsel %vm312, %v55, 0
  %v386 = vsel %vm312, %v56, 0
  %v389 = vsel %vm312, %v57, 0
  %v392 = vsel %vm312, %v58, 0
  %v395 = vsel %vm312, %v59, 0
  %v398 = vsel %vm312, %v60, 0
  %v401 = vsel %vm312, %v61, 0
  %v404 = vsel %vm312, %v62, 0
  %v407 = vsel %vm312, %v63, 0
  %409 = vmatpush.msra.mxu0 0.0
  %410 = vmatpush.msra.mxu0 0.0
  %411 = vmatpush.msra.mxu0 0.0
  %412 = vmatpush.msra.mxu0 0.0
  %413 = vmatpush.msra.mxu0 0.0
  %414 = vmatpush.msra.mxu0 0.0
  %415 = vmatpush.msra.mxu0 0.0
  %416 = vmatpush.msra.mxu0 0.0
  %417 = vmatpush.msra.mxu0 0.0
  %418 = vmatpush.msra.mxu0 0.0
  %419 = vmatpush.msra.mxu0 0.0
  %420 = vmatpush.msra.mxu0 0.0
  %421 = vmatpush.msra.mxu0 0.0
  %422 = vmatpush.msra.mxu0 0.0
  %423 = vmatpush.msra.mxu0 0.0
  %424 = vmatpush.msra.mxu0 %v96
  %425 = vmatmul.f32.gmra.mxu0 %v314
  %v426 = vpop.f32.mrf.mxu0
  %v427 = vadd.f32 %v217, %v426
  %428 = vmatmul.f32.gmra.mxu0 %v317
  %v429 = vpop.f32.mrf.mxu0
  %v430 = vadd.f32 %v220, %v429
  %431 = vmatmul.f32.gmra.mxu0 %v320
  %v432 = vpop.f32.mrf.mxu0
  %v433 = vadd.f32 %v223, %v432
  %434 = vmatmul.f32.gmra.mxu0 %v323
  %v435 = vpop.f32.mrf.mxu0
  %v436 = vadd.f32 %v226, %v435
  %437 = vmatmul.f32.gmra.mxu0 %v326
  %v438 = vpop.f32.mrf.mxu0
  %v439 = vadd.f32 %v229, %v438
  %440 = vmatmul.f32.gmra.mxu0 %v329
  %v441 = vpop.f32.mrf.mxu0
  %v442 = vadd.f32 %v232, %v441
  %443 = vmatmul.f32.gmra.mxu0 %v332
  %v444 = vpop.f32.mrf.mxu0
  %v445 = vadd.f32 %v235, %v444
  %446 = vmatmul.f32.gmra.mxu0 %v335
  %v447 = vpop.f32.mrf.mxu0
  %v448 = vadd.f32 %v238, %v447
  %449 = vmatmul.f32.gmra.mxu0 %v338
  %v450 = vpop.f32.mrf.mxu0
  %v451 = vadd.f32 %v241, %v450
  %452 = vmatmul.f32.gmra.mxu0 %v341
  %v453 = vpop.f32.mrf.mxu0
  %v454 = vadd.f32 %v244, %v453
  %455 = vmatmul.f32.gmra.mxu0 %v344
  %v456 = vpop.f32.mrf.mxu0
  %v457 = vadd.f32 %v247, %v456
  %458 = vmatmul.f32.gmra.mxu0 %v347
  %v459 = vpop.f32.mrf.mxu0
  %v460 = vadd.f32 %v250, %v459
  %461 = vmatmul.f32.gmra.mxu0 %v350
  %v462 = vpop.f32.mrf.mxu0
  %v463 = vadd.f32 %v253, %v462
  %464 = vmatmul.f32.gmra.mxu0 %v353
  %v465 = vpop.f32.mrf.mxu0
  %v466 = vadd.f32 %v256, %v465
  %467 = vmatmul.f32.gmra.mxu0 %v356
  %v468 = vpop.f32.mrf.mxu0
  %v469 = vadd.f32 %v259, %v468
  %470 = vmatmul.f32.gmra.mxu0 %v359
  %v471 = vpop.f32.mrf.mxu0
  %v472 = vadd.f32 %v262, %v471
  %473 = vmatmul.f32.gmra.mxu0 %v362
  %v474 = vpop.f32.mrf.mxu0
  %v475 = vadd.f32 %v265, %v474
  %476 = vmatmul.f32.gmra.mxu0 %v365
  %v477 = vpop.f32.mrf.mxu0
  %v478 = vadd.f32 %v268, %v477
  %479 = vmatmul.f32.gmra.mxu0 %v368
  %v480 = vpop.f32.mrf.mxu0
  %v481 = vadd.f32 %v271, %v480
  %482 = vmatmul.f32.gmra.mxu0 %v371
  %v483 = vpop.f32.mrf.mxu0
  %v484 = vadd.f32 %v274, %v483
  %485 = vmatmul.f32.gmra.mxu0 %v374
  %v486 = vpop.f32.mrf.mxu0
  %v487 = vadd.f32 %v277, %v486
  %488 = vmatmul.f32.gmra.mxu0 %v377
  %v489 = vpop.f32.mrf.mxu0
  %v490 = vadd.f32 %v280, %v489
  %491 = vmatmul.f32.gmra.mxu0 %v380
  %v492 = vpop.f32.mrf.mxu0
  %v493 = vadd.f32 %v283, %v492
  %494 = vmatmul.f32.gmra.mxu0 %v383
  %v495 = vpop.f32.mrf.mxu0
  %v496 = vadd.f32 %v286, %v495
  %497 = vmatmul.f32.gmra.mxu0 %v386
  %v498 = vpop.f32.mrf.mxu0
  %v499 = vadd.f32 %v289, %v498
  %500 = vmatmul.f32.gmra.mxu0 %v389
  %v501 = vpop.f32.mrf.mxu0
  %v502 = vadd.f32 %v292, %v501
  %503 = vmatmul.f32.gmra.mxu0 %v392
  %v504 = vpop.f32.mrf.mxu0
  %v505 = vadd.f32 %v295, %v504
  %506 = vmatmul.f32.gmra.mxu0 %v395
  %v507 = vpop.f32.mrf.mxu0
  %v508 = vadd.f32 %v298, %v507
  %509 = vmatmul.f32.gmra.mxu0 %v398
  %v510 = vpop.f32.mrf.mxu0
  %v511 = vadd.f32 %v301, %v510
  %512 = vmatmul.f32.gmra.mxu0 %v401
  %v513 = vpop.f32.mrf.mxu0
  %v514 = vadd.f32 %v304, %v513
  %515 = vmatmul.f32.gmra.mxu0 %v404
  %v516 = vpop.f32.mrf.mxu0
  %v517 = vadd.f32 %v307, %v516
  %518 = vmatmul.f32.gmra.mxu0 %v407
  %v519 = vpop.f32.mrf.mxu0
  %v520 = vadd.f32 %v310, %v519
  %521 = vdwg.mxu0
  %v522 = vld [vmem:[%s4] sm:$0x1]
  %v524 = vperm.slane %v522, 0
  %v526 = vadd.f32 %v427, %v524
  %v527 = vadd.f32 %v430, %v524
  %v528 = vadd.f32 %v433, %v524
  %v529 = vadd.f32 %v436, %v524
  %v530 = vadd.f32 %v439, %v524
  %v531 = vadd.f32 %v442, %v524
  %v532 = vadd.f32 %v445, %v524
  %v533 = vadd.f32 %v448, %v524
  %v534 = vadd.f32 %v451, %v524
  %v535 = vadd.f32 %v454, %v524
  %v536 = vadd.f32 %v457, %v524
  %v537 = vadd.f32 %v460, %v524
  %v538 = vadd.f32 %v463, %v524
  %v539 = vadd.f32 %v466, %v524
  %v540 = vadd.f32 %v469, %v524
  %v541 = vadd.f32 %v472, %v524
  %v542 = vadd.f32 %v475, %v524
  %v543 = vadd.f32 %v478, %v524
  %v544 = vadd.f32 %v481, %v524
  %v545 = vadd.f32 %v484, %v524
  %v546 = vadd.f32 %v487, %v524
  %v547 = vadd.f32 %v490, %v524
  %v548 = vadd.f32 %v493, %v524
  %v549 = vadd.f32 %v496, %v524
  %v550 = vadd.f32 %v499, %v524
  %v551 = vadd.f32 %v502, %v524
  %v552 = vadd.f32 %v505, %v524
  %v553 = vadd.f32 %v508, %v524
  %v554 = vadd.f32 %v511, %v524
  %v555 = vadd.f32 %v514, %v524
  %v556 = vadd.f32 %v517, %v524
  %v557 = vadd.f32 %v520, %v524
  %v558 = vmax.f32 %v526, 0.0
  %v559 = vmax.f32 %v527, 0.0
  %v560 = vmax.f32 %v528, 0.0
  %v561 = vmax.f32 %v529, 0.0
  %v562 = vmax.f32 %v530, 0.0
  %v563 = vmax.f32 %v531, 0.0
  %v564 = vmax.f32 %v532, 0.0
  %v565 = vmax.f32 %v533, 0.0
  %v566 = vmax.f32 %v534, 0.0
  %v567 = vmax.f32 %v535, 0.0
  %v568 = vmax.f32 %v536, 0.0
  %v569 = vmax.f32 %v537, 0.0
  %v570 = vmax.f32 %v538, 0.0
  %v571 = vmax.f32 %v539, 0.0
  %v572 = vmax.f32 %v540, 0.0
  %v573 = vmax.f32 %v541, 0.0
  %v574 = vmax.f32 %v542, 0.0
  %v575 = vmax.f32 %v543, 0.0
  %v576 = vmax.f32 %v544, 0.0
  %v577 = vmax.f32 %v545, 0.0
  %v578 = vmax.f32 %v546, 0.0
  %v579 = vmax.f32 %v547, 0.0
  %v580 = vmax.f32 %v548, 0.0
  %v581 = vmax.f32 %v549, 0.0
  %v582 = vmax.f32 %v550, 0.0
  %v583 = vmax.f32 %v551, 0.0
  %v584 = vmax.f32 %v552, 0.0
  %v585 = vmax.f32 %v553, 0.0
  %v586 = vmax.f32 %v554, 0.0
  %v587 = vmax.f32 %v555, 0.0
  %v588 = vmax.f32 %v556, 0.0
  %v589 = vmax.f32 %v557, 0.0
  %v590 = vld [vmem:[%s5] sm:$0xff]
  %v591 = vld [vmem:[%s5 + $0x8] sm:$0xff]
  %v592 = vld [vmem:[%s5 + $0x10] sm:$0xff]
  %v593 = vld [vmem:[%s5 + $0x18] sm:$0xff]
  %v594 = vld [vmem:[%s6] sm:$0x1]
  %v596 = vperm.slane %v594, 0
  %vm598 = vcmask 261120
  %v600 = vsel %vm598, %v558, 0
  %v603 = vsel %vm598, %v559, 0
  %v606 = vsel %vm598, %v560, 0
  %v609 = vsel %vm598, %v561, 0
  %v612 = vsel %vm598, %v562, 0
  %v615 = vsel %vm598, %v563, 0
  %v618 = vsel %vm598, %v564, 0
  %v621 = vsel %vm598, %v565, 0
  %v624 = vsel %vm598, %v566, 0
  %v627 = vsel %vm598, %v567, 0
  %v630 = vsel %vm598, %v568, 0
  %v633 = vsel %vm598, %v569, 0
  %v636 = vsel %vm598, %v570, 0
  %v639 = vsel %vm598, %v571, 0
  %v642 = vsel %vm598, %v572, 0
  %v645 = vsel %vm598, %v573, 0
  %v648 = vsel %vm598, %v574, 0
  %v651 = vsel %vm598, %v575, 0
  %v654 = vsel %vm598, %v576, 0
  %v657 = vsel %vm598, %v577, 0
  %v660 = vsel %vm598, %v578, 0
  %v663 = vsel %vm598, %v579, 0
  %v666 = vsel %vm598, %v580, 0
  %v669 = vsel %vm598, %v581, 0
  %v672 = vsel %vm598, %v582, 0
  %v675 = vsel %vm598, %v583, 0
  %v678 = vsel %vm598, %v584, 0
  %v681 = vsel %vm598, %v585, 0
  %v684 = vsel %vm598, %v586, 0
  %v687 = vsel %vm598, %v587, 0
  %v690 = vsel %vm598, %v588, 0
  %v693 = vsel %vm598, %v589, 0
  %695 = vmatpush.msra.mxu0 0.0
  %696 = vmatpush.msra.mxu0 0.0
  %697 = vmatpush.msra.mxu0 0.0
  %698 = vmatpush.msra.mxu0 0.0
  %699 = vmatpush.msra.mxu0 0.0
  %700 = vmatpush.msra.mxu0 0.0
  %701 = vmatpush.msra.mxu0 0.0
  %702 = vmatpush.msra.mxu0 0.0
  %703 = vmatpush.msra.mxu0 0.0
  %704 = vmatpush.msra.mxu0 0.0
  %705 = vmatpush.msra.mxu0 0.0
  %706 = vmatpush.msra.mxu0 0.0
  %707 = vmatpush.msra.mxu0 %v593
  %708 = vmatpush.msra.mxu0 %v592
  %709 = vmatpush.msra.mxu0 %v591
  %710 = vmatpush.msra.mxu0 %v590
  %711 = vmatmul.f32.gmra.mxu0 %v600
  %v712 = vpop.f32.mrf.mxu0
  %v713 = vadd.f32 %v596, %v712
  %714 = vmatmul.f32.gmra.mxu0 %v603
  %v715 = vpop.f32.mrf.mxu0
  %v716 = vadd.f32 %v596, %v715
  %717 = vmatmul.f32.gmra.mxu0 %v606
  %v718 = vpop.f32.mrf.mxu0
  %v719 = vadd.f32 %v596, %v718
  %720 = vmatmul.f32.gmra.mxu0 %v609
  %v721 = vpop.f32.mrf.mxu0
  %v722 = vadd.f32 %v596, %v721
  %723 = vmatmul.f32.gmra.mxu0 %v612
  %v724 = vpop.f32.mrf.mxu0
  %v725 = vadd.f32 %v596, %v724
  %726 = vmatmul.f32.gmra.mxu0 %v615
  %v727 = vpop.f32.mrf.mxu0
  %v728 = vadd.f32 %v596, %v727
  %729 = vmatmul.f32.gmra.mxu0 %v618
  %v730 = vpop.f32.mrf.mxu0
  %v731 = vadd.f32 %v596, %v730
  %732 = vmatmul.f32.gmra.mxu0 %v621
  %v733 = vpop.f32.mrf.mxu0
  %v734 = vadd.f32 %v596, %v733
  %735 = vmatmul.f32.gmra.mxu0 %v624
  %v736 = vpop.f32.mrf.mxu0
  %v737 = vadd.f32 %v596, %v736
  %738 = vmatmul.f32.gmra.mxu0 %v627
  %v739 = vpop.f32.mrf.mxu0
  %v740 = vadd.f32 %v596, %v739
  %741 = vmatmul.f32.gmra.mxu0 %v630
  %v742 = vpop.f32.mrf.mxu0
  %v743 = vadd.f32 %v596, %v742
  %744 = vmatmul.f32.gmra.mxu0 %v633
  %v745 = vpop.f32.mrf.mxu0
  %v746 = vadd.f32 %v596, %v745
  %747 = vmatmul.f32.gmra.mxu0 %v636
  %v748 = vpop.f32.mrf.mxu0
  %v749 = vadd.f32 %v596, %v748
  %750 = vmatmul.f32.gmra.mxu0 %v639
  %v751 = vpop.f32.mrf.mxu0
  %v752 = vadd.f32 %v596, %v751
  %753 = vmatmul.f32.gmra.mxu0 %v642
  %v754 = vpop.f32.mrf.mxu0
  %v755 = vadd.f32 %v596, %v754
  %756 = vmatmul.f32.gmra.mxu0 %v645
  %v757 = vpop.f32.mrf.mxu0
  %v758 = vadd.f32 %v596, %v757
  %759 = vmatmul.f32.gmra.mxu0 %v648
  %v760 = vpop.f32.mrf.mxu0
  %v761 = vadd.f32 %v596, %v760
  %762 = vmatmul.f32.gmra.mxu0 %v651
  %v763 = vpop.f32.mrf.mxu0
  %v764 = vadd.f32 %v596, %v763
  %765 = vmatmul.f32.gmra.mxu0 %v654
  %v766 = vpop.f32.mrf.mxu0
  %v767 = vadd.f32 %v596, %v766
  %768 = vmatmul.f32.gmra.mxu0 %v657
  %v769 = vpop.f32.mrf.mxu0
  %v770 = vadd.f32 %v596, %v769
  %771 = vmatmul.f32.gmra.mxu0 %v660
  %v772 = vpop.f32.mrf.mxu0
  %v773 = vadd.f32 %v596, %v772
  %774 = vmatmul.f32.gmra.mxu0 %v663
  %v775 = vpop.f32.mrf.mxu0
  %v776 = vadd.f32 %v596, %v775
  %777 = vmatmul.f32.gmra.mxu0 %v666
  %v778 = vpop.f32.mrf.mxu0
  %v779 = vadd.f32 %v596, %v778
  %780 = vmatmul.f32.gmra.mxu0 %v669
  %v781 = vpop.f32.mrf.mxu0
  %v782 = vadd.f32 %v596, %v781
  %783 = vmatmul.f32.gmra.mxu0 %v672
  %v784 = vpop.f32.mrf.mxu0
  %v785 = vadd.f32 %v596, %v784
  %786 = vmatmul.f32.gmra.mxu0 %v675
  %v787 = vpop.f32.mrf.mxu0
  %v788 = vadd.f32 %v596, %v787
  %789 = vmatmul.f32.gmra.mxu0 %v678
  %v790 = vpop.f32.mrf.mxu0
  %v791 = vadd.f32 %v596, %v790
  %792 = vmatmul.f32.gmra.mxu0 %v681
  %v793 = vpop.f32.mrf.mxu0
  %v794 = vadd.f32 %v596, %v793
  %795 = vmatmul.f32.gmra.mxu0 %v684
  %v796 = vpop.f32.mrf.mxu0
  %v797 = vadd.f32 %v596, %v796
  %798 = vmatmul.f32.gmra.mxu0 %v687
  %v799 = vpop.f32.mrf.mxu0
  %v800 = vadd.f32 %v596, %v799
  %801 = vmatmul.f32.gmra.mxu0 %v690
  %v802 = vpop.f32.mrf.mxu0
  %v803 = vadd.f32 %v596, %v802
  %804 = vmatmul.f32.gmra.mxu0 %v693
  %v805 = vpop.f32.mrf.mxu0
  %v806 = vadd.f32 %v596, %v805
  %807 = vdwg.mxu0
  %v808 = vmax.f32 %v713, 0.0
  %v809 = vmax.f32 %v716, 0.0
  %v810 = vmax.f32 %v719, 0.0
  %v811 = vmax.f32 %v722, 0.0
  %v812 = vmax.f32 %v725, 0.0
  %v813 = vmax.f32 %v728, 0.0
  %v814 = vmax.f32 %v731, 0.0
  %v815 = vmax.f32 %v734, 0.0
  %v816 = vmax.f32 %v737, 0.0
  %v817 = vmax.f32 %v740, 0.0
  %v818 = vmax.f32 %v743, 0.0
  %v819 = vmax.f32 %v746, 0.0
  %v820 = vmax.f32 %v749, 0.0
  %v821 = vmax.f32 %v752, 0.0
  %v822 = vmax.f32 %v755, 0.0
  %v823 = vmax.f32 %v758, 0.0
  %v824 = vmax.f32 %v761, 0.0
  %v825 = vmax.f32 %v764, 0.0
  %v826 = vmax.f32 %v767, 0.0
  %v827 = vmax.f32 %v770, 0.0
  %v828 = vmax.f32 %v773, 0.0
  %v829 = vmax.f32 %v776, 0.0
  %v830 = vmax.f32 %v779, 0.0
  %v831 = vmax.f32 %v782, 0.0
  %v832 = vmax.f32 %v785, 0.0
  %v833 = vmax.f32 %v788, 0.0
  %v834 = vmax.f32 %v791, 0.0
  %v835 = vmax.f32 %v794, 0.0
  %v836 = vmax.f32 %v797, 0.0
  %v837 = vmax.f32 %v800, 0.0
  %v838 = vmax.f32 %v803, 0.0
  %v839 = vmax.f32 %v806, 0.0
  %v840 = vld [vmem:[%s7] sm:$0xff]
  %v841 = vld [vmem:[%s7 + $0x8] sm:$0xff]
  %v842 = vld [vmem:[%s7 + $0x10] sm:$0xff]
  %v843 = vld [vmem:[%s7 + $0x18] sm:$0xff]
  %v845 = vsel %vm598, %v808, 0
  %v848 = vsel %vm598, %v809, 0
  %v851 = vsel %vm598, %v810, 0
  %v854 = vsel %vm598, %v811, 0
  %v857 = vsel %vm598, %v812, 0
  %v860 = vsel %vm598, %v813, 0
  %v863 = vsel %vm598, %v814, 0
  %v866 = vsel %vm598, %v815, 0
  %v869 = vsel %vm598, %v816, 0
  %v872 = vsel %vm598, %v817, 0
  %v875 = vsel %vm598, %v818, 0
  %v878 = vsel %vm598, %v819, 0
  %v881 = vsel %vm598, %v820, 0
  %v884 = vsel %vm598, %v821, 0
  %v887 = vsel %vm598, %v822, 0
  %v890 = vsel %vm598, %v823, 0
  %v893 = vsel %vm598, %v824, 0
  %v896 = vsel %vm598, %v825, 0
  %v899 = vsel %vm598, %v826, 0
  %v902 = vsel %vm598, %v827, 0
  %v905 = vsel %vm598, %v828, 0
  %v908 = vsel %vm598, %v829, 0
  %v911 = vsel %vm598, %v830, 0
  %v914 = vsel %vm598, %v831, 0
  %v917 = vsel %vm598, %v832, 0
  %v920 = vsel %vm598, %v833, 0
  %v923 = vsel %vm598, %v834, 0
  %v926 = vsel %vm598, %v835, 0
  %v929 = vsel %vm598, %v836, 0
  %v932 = vsel %vm598, %v837, 0
  %v935 = vsel %vm598, %v838, 0
  %v938 = vsel %vm598, %v839, 0
  %940 = vmatpush.msra.mxu0 0.0
  %941 = vmatpush.msra.mxu0 0.0
  %942 = vmatpush.msra.mxu0 0.0
  %943 = vmatpush.msra.mxu0 0.0
  %944 = vmatpush.msra.mxu0 0.0
  %945 = vmatpush.msra.mxu0 0.0
  %946 = vmatpush.msra.mxu0 0.0
  %947 = vmatpush.msra.mxu0 0.0
  %948 = vmatpush.msra.mxu0 0.0
  %949 = vmatpush.msra.mxu0 0.0
  %950 = vmatpush.msra.mxu0 0.0
  %951 = vmatpush.msra.mxu0 0.0
  %952 = vmatpush.msra.mxu0 %v843
  %953 = vmatpush.msra.mxu0 %v842
  %954 = vmatpush.msra.mxu0 %v841
  %955 = vmatpush.msra.mxu0 %v840
  %956 = vmatmul.f32.gmra.mxu0 %v845
  %v957 = vpop.f32.mrf.mxu0
  %v958 = vadd.f32 0.0, %v957
  %959 = vmatmul.f32.gmra.mxu0 %v848
  %v960 = vpop.f32.mrf.mxu0
  %v961 = vadd.f32 0.0, %v960
  %962 = vmatmul.f32.gmra.mxu0 %v851
  %v963 = vpop.f32.mrf.mxu0
  %v964 = vadd.f32 0.0, %v963
  %965 = vmatmul.f32.gmra.mxu0 %v854
  %v966 = vpop.f32.mrf.mxu0
  %v967 = vadd.f32 0.0, %v966
  %968 = vmatmul.f32.gmra.mxu0 %v857
  %v969 = vpop.f32.mrf.mxu0
  %v970 = vadd.f32 0.0, %v969
  %971 = vmatmul.f32.gmra.mxu0 %v860
  %v972 = vpop.f32.mrf.mxu0
  %v973 = vadd.f32 0.0, %v972
  %974 = vmatmul.f32.gmra.mxu0 %v863
  %v975 = vpop.f32.mrf.mxu0
  %v976 = vadd.f32 0.0, %v975
  %977 = vmatmul.f32.gmra.mxu0 %v866
  %v978 = vpop.f32.mrf.mxu0
  %v979 = vadd.f32 0.0, %v978
  %980 = vmatmul.f32.gmra.mxu0 %v869
  %v981 = vpop.f32.mrf.mxu0
  %v982 = vadd.f32 0.0, %v981
  %983 = vmatmul.f32.gmra.mxu0 %v872
  %v984 = vpop.f32.mrf.mxu0
  %v985 = vadd.f32 0.0, %v984
  %986 = vmatmul.f32.gmra.mxu0 %v875
  %v987 = vpop.f32.mrf.mxu0
  %v988 = vadd.f32 0.0, %v987
  %989 = vmatmul.f32.gmra.mxu0 %v878
  %v990 = vpop.f32.mrf.mxu0
  %v991 = vadd.f32 0.0, %v990
  %992 = vmatmul.f32.gmra.mxu0 %v881
  %v993 = vpop.f32.mrf.mxu0
  %v994 = vadd.f32 0.0, %v993
  %995 = vmatmul.f32.gmra.mxu0 %v884
  %v996 = vpop.f32.mrf.mxu0
  %v997 = vadd.f32 0.0, %v996
  %998 = vmatmul.f32.gmra.mxu0 %v887
  %v999 = vpop.f32.mrf.mxu0
  %v1000 = vadd.f32 0.0, %v999
  %1001 = vmatmul.f32.gmra.mxu0 %v890
  %v1002 = vpop.f32.mrf.mxu0
  %v1003 = vadd.f32 0.0, %v1002
  %1004 = vmatmul.f32.gmra.mxu0 %v893
  %v1005 = vpop.f32.mrf.mxu0
  %v1006 = vadd.f32 0.0, %v1005
  %1007 = vmatmul.f32.gmra.mxu0 %v896
  %v1008 = vpop.f32.mrf.mxu0
  %v1009 = vadd.f32 0.0, %v1008
  %1010 = vmatmul.f32.gmra.mxu0 %v899
  %v1011 = vpop.f32.mrf.mxu0
  %v1012 = vadd.f32 0.0, %v1011
  %1013 = vmatmul.f32.gmra.mxu0 %v902
  %v1014 = vpop.f32.mrf.mxu0
  %v1015 = vadd.f32 0.0, %v1014
  %1016 = vmatmul.f32.gmra.mxu0 %v905
  %v1017 = vpop.f32.mrf.mxu0
  %v1018 = vadd.f32 0.0, %v1017
  %1019 = vmatmul.f32.gmra.mxu0 %v908
  %v1020 = vpop.f32.mrf.mxu0
  %v1021 = vadd.f32 0.0, %v1020
  %1022 = vmatmul.f32.gmra.mxu0 %v911
  %v1023 = vpop.f32.mrf.mxu0
  %v1024 = vadd.f32 0.0, %v1023
  %1025 = vmatmul.f32.gmra.mxu0 %v914
  %v1026 = vpop.f32.mrf.mxu0
  %v1027 = vadd.f32 0.0, %v1026
  %1028 = vmatmul.f32.gmra.mxu0 %v917
  %v1029 = vpop.f32.mrf.mxu0
  %v1030 = vadd.f32 0.0, %v1029
  %1031 = vmatmul.f32.gmra.mxu0 %v920
  %v1032 = vpop.f32.mrf.mxu0
  %v1033 = vadd.f32 0.0, %v1032
  %1034 = vmatmul.f32.gmra.mxu0 %v923
  %v1035 = vpop.f32.mrf.mxu0
  %v1036 = vadd.f32 0.0, %v1035
  %1037 = vmatmul.f32.gmra.mxu0 %v926
  %v1038 = vpop.f32.mrf.mxu0
  %v1039 = vadd.f32 0.0, %v1038
  %1040 = vmatmul.f32.gmra.mxu0 %v929
  %v1041 = vpop.f32.mrf.mxu0
  %v1042 = vadd.f32 0.0, %v1041
  %1043 = vmatmul.f32.gmra.mxu0 %v932
  %v1044 = vpop.f32.mrf.mxu0
  %v1045 = vadd.f32 0.0, %v1044
  %1046 = vmatmul.f32.gmra.mxu0 %v935
  %v1047 = vpop.f32.mrf.mxu0
  %v1048 = vadd.f32 0.0, %v1047
  %1049 = vmatmul.f32.gmra.mxu0 %v938
  %v1050 = vpop.f32.mrf.mxu0
  %v1051 = vadd.f32 0.0, %v1050
  %1052 = vdwg.mxu0
  %v1053 = vadd.f32 %v32, %v958
  %v1054 = vadd.f32 %v33, %v961
  %v1055 = vadd.f32 %v34, %v964
  %v1056 = vadd.f32 %v35, %v967
  %v1057 = vadd.f32 %v36, %v970
  %v1058 = vadd.f32 %v37, %v973
  %v1059 = vadd.f32 %v38, %v976
  %v1060 = vadd.f32 %v39, %v979
  %v1061 = vadd.f32 %v40, %v982
  %v1062 = vadd.f32 %v41, %v985
  %v1063 = vadd.f32 %v42, %v988
  %v1064 = vadd.f32 %v43, %v991
  %v1065 = vadd.f32 %v44, %v994
  %v1066 = vadd.f32 %v45, %v997
  %v1067 = vadd.f32 %v46, %v1000
  %v1068 = vadd.f32 %v47, %v1003
  %v1069 = vadd.f32 %v48, %v1006
  %v1070 = vadd.f32 %v49, %v1009
  %v1071 = vadd.f32 %v50, %v1012
  %v1072 = vadd.f32 %v51, %v1015
  %v1073 = vadd.f32 %v52, %v1018
  %v1074 = vadd.f32 %v53, %v1021
  %v1075 = vadd.f32 %v54, %v1024
  %v1076 = vadd.f32 %v55, %v1027
  %v1077 = vadd.f32 %v56, %v1030
  %v1078 = vadd.f32 %v57, %v1033
  %v1079 = vadd.f32 %v58, %v1036
  %v1080 = vadd.f32 %v59, %v1039
  %v1081 = vadd.f32 %v60, %v1042
  %v1082 = vadd.f32 %v61, %v1045
  %v1083 = vadd.f32 %v62, %v1048
  %v1084 = vadd.f32 %v63, %v1051
  %v1085 = vld [vmem:[%s8] sm:$0x1]
  %v1087 = vperm.slane %v1085, 0
  %v1089 = vadd.f32 %v1053, %v1087
  %v1090 = vadd.f32 %v1054, %v1087
  %v1091 = vadd.f32 %v1055, %v1087
  %v1092 = vadd.f32 %v1056, %v1087
  %v1093 = vadd.f32 %v1057, %v1087
  %v1094 = vadd.f32 %v1058, %v1087
  %v1095 = vadd.f32 %v1059, %v1087
  %v1096 = vadd.f32 %v1060, %v1087
  %v1097 = vadd.f32 %v1061, %v1087
  %v1098 = vadd.f32 %v1062, %v1087
  %v1099 = vadd.f32 %v1063, %v1087
  %v1100 = vadd.f32 %v1064, %v1087
  %v1101 = vadd.f32 %v1065, %v1087
  %v1102 = vadd.f32 %v1066, %v1087
  %v1103 = vadd.f32 %v1067, %v1087
  %v1104 = vadd.f32 %v1068, %v1087
  %v1105 = vadd.f32 %v1069, %v1087
  %v1106 = vadd.f32 %v1070, %v1087
  %v1107 = vadd.f32 %v1071, %v1087
  %v1108 = vadd.f32 %v1072, %v1087
  %v1109 = vadd.f32 %v1073, %v1087
  %v1110 = vadd.f32 %v1074, %v1087
  %v1111 = vadd.f32 %v1075, %v1087
  %v1112 = vadd.f32 %v1076, %v1087
  %v1113 = vadd.f32 %v1077, %v1087
  %v1114 = vadd.f32 %v1078, %v1087
  %v1115 = vadd.f32 %v1079, %v1087
  %v1116 = vadd.f32 %v1080, %v1087
  %v1117 = vadd.f32 %v1081, %v1087
  %v1118 = vadd.f32 %v1082, %v1087
  %v1119 = vadd.f32 %v1083, %v1087
  %v1120 = vadd.f32 %v1084, %v1087
  %1121 = vst.msk [vmem:[%s9] sm:$0xff] %vm312, %v1089
  %1122 = vst.msk [vmem:[%s9 + $0x8] sm:$0xff] %vm312, %v1090
  %1123 = vst.msk [vmem:[%s9 + $0x10] sm:$0xff] %vm312, %v1091
  %1124 = vst.msk [vmem:[%s9 + $0x18] sm:$0xff] %vm312, %v1092
  %1125 = vst.msk [vmem:[%s9 + $0x20] sm:$0xff] %vm312, %v1093
  %1126 = vst.msk [vmem:[%s9 + $0x28] sm:$0xff] %vm312, %v1094
  %1127 = vst.msk [vmem:[%s9 + $0x30] sm:$0xff] %vm312, %v1095
  %1128 = vst.msk [vmem:[%s9 + $0x38] sm:$0xff] %vm312, %v1096
  %1129 = vst.msk [vmem:[%s9 + $0x40] sm:$0xff] %vm312, %v1097
  %1130 = vst.msk [vmem:[%s9 + $0x48] sm:$0xff] %vm312, %v1098
  %1131 = vst.msk [vmem:[%s9 + $0x50] sm:$0xff] %vm312, %v1099
  %1132 = vst.msk [vmem:[%s9 + $0x58] sm:$0xff] %vm312, %v1100
  %1133 = vst.msk [vmem:[%s9 + $0x60] sm:$0xff] %vm312, %v1101
  %1134 = vst.msk [vmem:[%s9 + $0x68] sm:$0xff] %vm312, %v1102
  %1135 = vst.msk [vmem:[%s9 + $0x70] sm:$0xff] %vm312, %v1103
  %1136 = vst.msk [vmem:[%s9 + $0x78] sm:$0xff] %vm312, %v1104
  %1137 = vst.msk [vmem:[%s9 + $0x80] sm:$0xff] %vm312, %v1105
  %1138 = vst.msk [vmem:[%s9 + $0x88] sm:$0xff] %vm312, %v1106
  %1139 = vst.msk [vmem:[%s9 + $0x90] sm:$0xff] %vm312, %v1107
  %1140 = vst.msk [vmem:[%s9 + $0x98] sm:$0xff] %vm312, %v1108
  %1141 = vst.msk [vmem:[%s9 + $0xa0] sm:$0xff] %vm312, %v1109
  %1142 = vst.msk [vmem:[%s9 + $0xa8] sm:$0xff] %vm312, %v1110
  %1143 = vst.msk [vmem:[%s9 + $0xb0] sm:$0xff] %vm312, %v1111
  %1144 = vst.msk [vmem:[%s9 + $0xb8] sm:$0xff] %vm312, %v1112
  %1145 = vst.msk [vmem:[%s9 + $0xc0] sm:$0xff] %vm312, %v1113
  %1146 = vst.msk [vmem:[%s9 + $0xc8] sm:$0xff] %vm312, %v1114
  %1147 = vst.msk [vmem:[%s9 + $0xd0] sm:$0xff] %vm312, %v1115
  %1148 = vst.msk [vmem:[%s9 + $0xd8] sm:$0xff] %vm312, %v1116
  %1149 = vst.msk [vmem:[%s9 + $0xe0] sm:$0xff] %vm312, %v1117
  %1150 = vst.msk [vmem:[%s9 + $0xe8] sm:$0xff] %vm312, %v1118
  %1151 = vst.msk [vmem:[%s9 + $0xf0] sm:$0xff] %vm312, %v1119
  %1152 = vst.msk [vmem:[%s9 + $0xf8] sm:$0xff] %vm312, %v1120
  // Predicated region
  $region38: #{dynamics_forward.1} parent=0 // pred_check
    _
  $region39: #{dynamics_forward.1} parent=0 // pred_check_branch
    %1154 = sbr.rel (0) target = $region41
  $region40: #{dynamics_forward.1} parent=0 // pred_region
    _
  $region41: #{dynamics_forward.1} parent=0 // pred_fallthru
    _
  // Predicated region
  $region42: #{dynamics_forward.1} parent=0 // pred_check
    _
  $region43: #{dynamics_forward.1} parent=0 // pred_check_branch
    %1156 = sbr.rel (0) target = $region45
  $region44: #{dynamics_forward.1} parent=0 // pred_region
    _
  $region45: #{dynamics_forward.1} parent=0 // pred_fallthru
    _

</llo_original>
